<compile_context>
chip_gen: v7x
topology: tpu7x:2x2x1
jax: 0.10.0
libtpu: 0.0.40
codegen_flags: <defaults>
</compile_context>

<pallas_src>
import functools

import jax
import jax.numpy as jnp
from jax.experimental import pallas as pl
from jax.experimental.pallas import tpu as pltpu


def _add_pe_kernel(x_ref, pe_ref, o_ref):
    # x_ref / pe_ref / o_ref: (tR, L) VMEM tiles; pe is broadcast over batch by
    # its index_map (batch block index fixed to 0, constant along inner axis).
    o_ref[...] = x_ref[...] + pe_ref[...]


def _add_pe_dropout_kernel(x_ref, pe_ref, bits_ref, o_ref, *, threshold, scale):
    # bits_ref: uint32 random bits. keep iff bits >= threshold, where
    # threshold = round(rate * 2^32)  ->  P(keep) = 1 - rate.
    y = x_ref[...] + pe_ref[...]
    keep = bits_ref[...] >= jnp.uint32(threshold)
    o_ref[...] = jnp.where(keep, y * scale, jnp.zeros_like(y)).astype(o_ref.dtype)


def learnable_positional_encoding(x, pe, *, dropout_p=0.1, training=False,
                                  seed=0, donate_x=False):
    """x: (B, T, D); pe: (1, T, D) learnable parameter. Returns dropout(x + pe)."""
    B, T, D = x.shape
    assert pe.shape == (1, T, D), "pe must be (1, max_len, emb_dim) == (1, T, D)"

    use_dropout = training and dropout_p > 0.0

    # Lane-sparse fallback: a Pallas output with last dim < 128 forces masked
    # partial stores; for a pure elementwise op plain XLA is already near the
    # HBM roofline, so just do it in XLA for awkward shapes.
    if (T * D) % 128 != 0:
        y = x + pe
        if use_dropout:
            keep = jax.random.bernoulli(jax.random.PRNGKey(seed),
                                        1.0 - dropout_p, y.shape)
            y = jnp.where(keep, y / (1.0 - dropout_p), 0.0).astype(x.dtype)
        return y

    # Lane-dense layout: fold (T, D) into (R, 128) -> every vreg / vector store
    # fully populated even when emb_dim < 128.
    R, L = (T * D) // 128, 128
    x2 = x.reshape(B, R, L)
    pe2 = pe.reshape(1, R, L)

    # Row tile: 4096 x 128 x 4B = 2 MiB/buffer; with <= 4 arrays double
    # buffered that's <= 16 MiB, comfortably under the explicit 64 MiB limit
    # (v7x physical VMEM is 64 MiB/TC, so do not size past ~32 MiB).
    tR = R if R <= 4096 else 4096
    grid = (pl.cdiv(R, tR), B)   # batch innermost -> pe block index constant
                                 # along the inner axis -> pe DMA'd once/tile.

    cparams = pltpu.CompilerParams(
        dimension_semantics=("parallel", "arbitrary"),
        vmem_limit_bytes=64 * 1024 * 1024,
    )
    aliases = {0: 0} if donate_x else {}

    x_spec = pl.BlockSpec((None, tR, L), lambda r, b: (b, r, 0))
    pe_spec = pl.BlockSpec((None, tR, L), lambda r, b: (0, r, 0))
    out_spec = pl.BlockSpec((None, tR, L), lambda r, b: (b, r, 0))

    if use_dropout:
        # Random bits generated in the wrapper (portable across TPU/interpret);
        # integer-threshold compare in-kernel (no int->f32 convert / extra mul).
        bits = jax.random.bits(jax.random.PRNGKey(seed), (B, R, L),
                               dtype=jnp.uint32)
        threshold = min(int(round(float(dropout_p) * 4294967296.0)), 4294967295)
        scale = 1.0 / (1.0 - float(dropout_p))
        out2 = pl.pallas_call(
            functools.partial(_add_pe_dropout_kernel,
                              threshold=threshold, scale=scale),
            out_shape=jax.ShapeDtypeStruct((B, R, L), x.dtype),
            grid=grid,
            in_specs=[x_spec, pe_spec,
                      pl.BlockSpec((None, tR, L), lambda r, b: (b, r, 0))],
            out_specs=out_spec,
            compiler_params=cparams,
            input_output_aliases=aliases,
        )(x2, pe2, bits)
    else:
        out2 = pl.pallas_call(
            _add_pe_kernel,
            out_shape=jax.ShapeDtypeStruct((B, R, L), x.dtype),
            grid=grid,
            in_specs=[x_spec, pe_spec],
            out_specs=out_spec,
            compiler_params=cparams,
            input_output_aliases=aliases,
        )(x2, pe2)

    return out2.reshape(B, T, D)


def learnable_positional_encoding_ref(x, pe):
    # eval-mode reference (dropout is identity at inference)
    return x + pe


if __name__ == "__main__":
    B, T, D = 2, 8, 32      # batch=2, max_len(seq)=8, emb_dim=32

    key = jax.random.PRNGKey(0)
    kx, kp = jax.random.split(key)
    x = jax.random.normal(kx, (B, T, D), dtype=jnp.float32)
    # nn.init.uniform_(self.pe, -0.02, 0.02)
    pe = jax.random.uniform(kp, (1, T, D), minval=-0.02, maxval=0.02,
                            dtype=jnp.float32)

    # Eval-mode forward (dropout disabled) — compare against reference.
    out = learnable_positional_encoding(x, pe, dropout_p=0.1, training=False)
    out = jax.block_until_ready(out)
    ref = learnable_positional_encoding_ref(x, pe)
    assert out.shape == (B, T, D)
    assert jnp.allclose(out, ref, atol=1e-6, rtol=1e-6), "mismatch vs reference"

    # Training-mode forward (fused dropout): every element must be either
    # dropped (exactly 0) or the kept value scaled by 1/(1-p).
    p = 0.5
    out_tr = learnable_positional_encoding(x, pe, dropout_p=p, training=True,
                                           seed=123)
    out_tr = jax.block_until_ready(out_tr)
    kept_ok = jnp.abs(out_tr - ref / (1.0 - p)) < 1e-4
    dropped = out_tr == 0.0
    assert out_tr.shape == (B, T, D)
    assert bool(jnp.all(kept_ok | dropped)), "dropout output inconsistent"
    # Sanity: with p=0.5 over 512 elements, at least something kept and dropped.
    assert bool(jnp.any(dropped)) and bool(jnp.any(~dropped)), "degenerate mask"

    print("KERNEL_OK")
</pallas_src>

<mosaic_0001>
module attributes {stable_mosaic.version = 11 : i64} {
  func.func @_add_pe_kernel(%arg0: i32, %arg1: i32, %arg2: memref<1x2x128xf32, #tpu.memory_space<vmem>>, %arg3: memref<1x2x128xf32, #tpu.memory_space<vmem>>, %arg4: memref<1x2x128xf32, #tpu.memory_space<vmem>>) attributes {dimension_semantics = [#tpu.dimension_semantics<parallel>, #tpu.dimension_semantics<arbitrary>], iteration_bounds = array<i64: 1, 2>, scalar_prefetch = 0 : i64, scratch_operands = 0 : i64, tpu.core_type = #tpu.core_type<tc>, window_params = [{transform_indices = @transform_0, window_bounds = array<i64: 1, 2, 128>}, {transform_indices = @transform_1, window_bounds = array<i64: 1, 2, 128>}, {transform_indices = @transform_2, window_bounds = array<i64: 1, 2, 128>}]} {
    %c0 = arith.constant 0 : index
    %c0_0 = arith.constant 0 : index
    %c0_1 = arith.constant 0 : index
    %0 = vector.load %arg2[%c0, %c0_0, %c0_1] : memref<1x2x128xf32, #tpu.memory_space<vmem>>, vector<1x2x128xf32>
    %1 = vector.shape_cast %0 : vector<1x2x128xf32> to vector<2x128xf32>
    %c0_2 = arith.constant 0 : index
    %c0_3 = arith.constant 0 : index
    %c0_4 = arith.constant 0 : index
    %2 = vector.load %arg3[%c0_2, %c0_3, %c0_4] : memref<1x2x128xf32, #tpu.memory_space<vmem>>, vector<1x2x128xf32>
    %3 = vector.shape_cast %2 : vector<1x2x128xf32> to vector<2x128xf32>
    %4 = arith.addf %1, %3 : vector<2x128xf32>
    %c0_5 = arith.constant 0 : index
    %c0_6 = arith.constant 0 : index
    %c0_7 = arith.constant 0 : index
    %5 = vector.load %arg4[%c0_5, %c0_6, %c0_7] : memref<1x2x128xf32, #tpu.memory_space<vmem>>, vector<1x2x128xf32>
    %6 = vector.shape_cast %5 : vector<1x2x128xf32> to vector<2x128xf32>
    %7 = vector.shape_cast %4 : vector<2x128xf32> to vector<1x2x128xf32>
    tpu.vector_store %arg4[%c0_5, %c0_6, %c0_7], %7 {strides = array<i32>} : memref<1x2x128xf32, #tpu.memory_space<vmem>>, vector<1x2x128xf32>,
    return
  }
  func.func @transform_0(%arg0: i32, %arg1: i32) -> (i32, i32, i32) {
    %c0_i32 = arith.constant 0 : i32
    %c0_i32_0 = arith.constant 0 : i32
    return %arg1, %arg0, %c0_i32 : i32, i32, i32
  }
  func.func @transform_1(%arg0: i32, %arg1: i32) -> (i32, i32, i32) {
    %c0_i32 = arith.constant 0 : i32
    %c0_i32_0 = arith.constant 0 : i32
    %c0_i32_1 = arith.constant 0 : i32
    return %c0_i32, %arg0, %c0_i32_0 : i32, i32, i32
  }
  func.func @transform_2(%arg0: i32, %arg1: i32) -> (i32, i32, i32) {
    %c0_i32 = arith.constant 0 : i32
    %c0_i32_0 = arith.constant 0 : i32
    return %arg1, %arg0, %c0_i32 : i32, i32, i32
  }
}

</mosaic_0001>

<llo_original>
// kernel: tpu_custom_call.1
$region0: #{tpu_custom_call.1}
  #allocation0 [shape = 'u32[]', space=smem, size = 0x4, offset = 0x4, fixed_abs, tag = 'smem constant byte address 0x4 - core index']
  #allocation1 [shape = 'u32[144,128]{1,0:T(1,128)}', space=vmem, size = 0x12000, scoped, tag = 'internal scratch']
  %s0 = inlined_call_operand.hbm [shape: f32[2,2,128], index: 0, kind: input, shape index: {}]
  %s1 = inlined_call_operand.hbm [shape: f32[1,2,128], index: 1, kind: input, shape index: {}]
  %s2 = inlined_call_operand.hbm [shape: f32[2,2,128], index: 2, kind: output, shape index: {}]
  %s3 = sld [smem:[#allocation0]]
  $region49: #{tpu_custom_call.1} parent=0
    _
  %s5 = ssub.s32 1, %s3
  %s6 = scalar_select 0, %s5, %s3
  $region1: #{tpu_custom_call.1} parent=0
    #allocation2 [shape = 'u8[2048]{0}', space=vmem, size = 0x800, scoped, tag = 'input window, operand 0']
    #allocation3 [shape = 's32[2]{0}', space=sflag, size = 0x8, scoped, tag = 'scoped memory for tpu_custom_call.1']
    #allocation4 [shape = 's32[2]{0}', space=sflag, size = 0x8, scoped, tag = 'scoped memory for tpu_custom_call.1']
    #allocation5 [shape = 'u8[1024]{0}', space=vmem, size = 0x400, scoped, tag = 'input window, operand 1, single buffered']
    #allocation6 [shape = 's32[1]{0}', space=sflag, size = 0x4, scoped, tag = 'scoped memory for tpu_custom_call.1']
    #allocation7 [shape = 'u8[2048]{0}', space=vmem, size = 0x800, scoped, tag = 'output window, operand 0']
    %7 = vsyncpa [#allocation3], 0
    %s8 = scalar_lea.sflag [#allocation3], 1
    %9 = vsyncpa %s8, 0
    %10 = vsyncpa [#allocation6], 0
    %11 = vsyncpa [#allocation4], 0
    %s12 = scalar_lea.sflag [#allocation4], 1
    %13 = vsyncpa %s12, 0
    loop: start=0, step=1, limit=4
    $region2: #{tpu_custom_call.1} parent=1 // loop_pre_header
      _
    $region3: #{tpu_custom_call.1} parent=1 // loop_header
      %s15 = sphi 0, %s19
      %p16 = scmp.ge.s32.totalorder %s15, 4
      %s22 = sphi 0, %s34
      %s23 = sphi 0, %s30
      %s24 = sphi 0, %s22
      %s25 = sphi 0, %s23
      %s26 = sphi 0, %s24
      %s27 = sphi 0, %s25
      %s39 = sphi 0, %s41
      %s42 = sphi 0, %s39
      %s43 = sphi 0, %s42
      %s59 = sphi 0, %s43
      %s65 = sphi 0, %s67
      %s68 = sphi 0, %s65
      %s69 = sphi 0, %s68
      %s85 = sphi 0, %s69
      %s93 = sphi 0, %s95
      %s96 = sphi 0, %s93
      %s97 = sphi 0, %s96
      %s113 = sphi 0, %s97
    $region4: #{tpu_custom_call.1} parent=1 // loop_header_branch
      %18 = sbr.rel (%p16) target = $region8
    $region5: #{tpu_custom_call.1} parent=1 // loop_body
      %s20 = ssub.s32 %s15, 1
      %s21 = ssub.s32 %s15, 2
      %s28 = sadd.s32 1, %s23
      %p29 = scmp.ge.s32.totalorder %s28, 2
      %s30 = scalar_select %p29, 0, %s28
      %s31 = sadd.s32 1, %s22
      %s32 = scalar_select %p29, %s31, %s22
      %p33 = scmp.ge.s32.totalorder %s32, 1
      %s34 = scalar_select %p33, 0, %s32
      %s35 = ssub.s32 %s23, %s30
      %s36 = ssub.s32 %s22, %s34
      %s37 = sor.u32 %s35, %s36
      %p38 = scmp.eq.s32.totalorder %s37, 0
      %s40 = sadd.s32 %s39, 1
      %s41 = scalar_select %p38, %s39, %s40
      %p44 = pneg %p38
      %p45 = scmp.eq.s32.totalorder %s15, 1
      %p46 = por %p44, %p45
      %p47 = scmp.ne.s32.totalorder %s39, %s42
      %p48 = scmp.eq.s32.totalorder %s15, 0
      %p49 = por %p47, %p48
      %p50 = scmp.ne.s32.totalorder %s39, %s42
      %p51 = scmp.eq.s32.totalorder %s20, 1
      %p52 = por %p50, %p51
      %p53 = scmp.ne.s32.totalorder %s42, %s43
      %p54 = scmp.eq.s32.totalorder %s20, 0
      %p55 = por %p53, %p54
      %p56 = scmp.ne.s32.totalorder %s42, %s43
      %p57 = scmp.eq.s32.totalorder %s21, 1
      %p58 = por %p56, %p57
      %p60 = scmp.ne.s32.totalorder %s43, %s59
      %p61 = scmp.eq.s32.totalorder %s21, 0
      %p62 = por %p60, %p61
      %s63 = ssub.s32 %s22, %s34
      %p64 = scmp.eq.s32.totalorder %s63, 0
      %s66 = sadd.s32 %s65, 1
      %s67 = scalar_select %p64, %s65, %s66
      %p70 = pneg %p64
      %p71 = scmp.eq.s32.totalorder %s15, 1
      %p72 = por %p70, %p71
      %p73 = scmp.ne.s32.totalorder %s65, %s68
      %p74 = scmp.eq.s32.totalorder %s15, 0
      %p75 = por %p73, %p74
      %p76 = scmp.ne.s32.totalorder %s65, %s68
      %p77 = scmp.eq.s32.totalorder %s20, 1
      %p78 = por %p76, %p77
      %p79 = scmp.ne.s32.totalorder %s68, %s69
      %p80 = scmp.eq.s32.totalorder %s20, 0
      %p81 = por %p79, %p80
      %p82 = scmp.ne.s32.totalorder %s68, %s69
      %p83 = scmp.eq.s32.totalorder %s21, 1
      %p84 = por %p82, %p83
      %p86 = scmp.ne.s32.totalorder %s69, %s85
      %p87 = scmp.eq.s32.totalorder %s21, 0
      %p88 = por %p86, %p87
      %s89 = ssub.s32 %s23, %s30
      %s90 = ssub.s32 %s22, %s34
      %s91 = sor.u32 %s89, %s90
      %p92 = scmp.eq.s32.totalorder %s91, 0
      %s94 = sadd.s32 %s93, 1
      %s95 = scalar_select %p92, %s93, %s94
      %p98 = pneg %p92
      %p99 = scmp.eq.s32.totalorder %s15, 1
      %p100 = por %p98, %p99
      %p101 = scmp.ne.s32.totalorder %s93, %s96
      %p102 = scmp.eq.s32.totalorder %s15, 0
      %p103 = por %p101, %p102
      %p104 = scmp.ne.s32.totalorder %s93, %s96
      %p105 = scmp.eq.s32.totalorder %s20, 1
      %p106 = por %p104, %p105
      %p107 = scmp.ne.s32.totalorder %s96, %s97
      %p108 = scmp.eq.s32.totalorder %s20, 0
      %p109 = por %p107, %p108
      %p110 = scmp.ne.s32.totalorder %s96, %s97
      %p111 = scmp.eq.s32.totalorder %s21, 1
      %p112 = por %p110, %p111
      %p114 = scmp.ne.s32.totalorder %s97, %s113
      %p115 = scmp.eq.s32.totalorder %s21, 0
      %p116 = por %p114, %p115
      %p117 = scmp.le.s32.totalorder 1, %s15
      %p118 = scmp.lt.s32.totalorder %s15, 3
      %p119 = pnand %p117, %p118
      %p120 = pneg %p119
      // Predicated region
      $region9: #{tpu_custom_call.1} parent=5 // pred_check
        _
      $region10: #{tpu_custom_call.1} parent=5 // pred_check_branch
        %122 = sbr.rel (%p119) target = $region12
      $region11: #{tpu_custom_call.1} parent=5 // pred_region
        %s123 = ssub.s32 %s15, 1
        // Predicated region
        $region13: #{tpu_custom_call.1} parent=11 // pred_check
          %p124 = pneg %p81
        $region14: #{tpu_custom_call.1} parent=11 // pred_check_branch
          %126 = sbr.rel (%p124) target = $region16
        $region15: #{tpu_custom_call.1} parent=11 // pred_region
          %s128 = ssub.s32 32, 32
          %129 = vsyncadd [#allocation6], %s128
          %s130 = smul.addr %s24, 32
          %s131 = scalar_lea.hbm %s1, %s130
          %s133 = sshll.u32 [#allocation5], 4
          %s134 = int_to_ptr.vmem [resolvable:$true] %s133
          %136 = dma.hbm_to_vmem [thread:$0]  %s131, 32, %s134, [#allocation6]
        $region16: #{tpu_custom_call.1} parent=11 // pred_fallthru
          _
      $region12: #{tpu_custom_call.1} parent=5 // pred_fallthru
        _
      %p137 = scmp.lt.s32.totalorder %s15, 2
      // Predicated region
      $region17: #{tpu_custom_call.1} parent=5 // pred_check
        %p138 = pneg %p137
      $region18: #{tpu_custom_call.1} parent=5 // pred_check_branch
        %140 = sbr.rel (%p138) target = $region20
      $region19: #{tpu_custom_call.1} parent=5 // pred_region
        // Predicated region
        $region21: #{tpu_custom_call.1} parent=19 // pred_check
          %p141 = pneg %p49
        $region22: #{tpu_custom_call.1} parent=19 // pred_check_branch
          %143 = sbr.rel (%p141) target = $region24
        $region23: #{tpu_custom_call.1} parent=19 // pred_region
          %s144 = sand.u32 %s39, 1
          %s145 = scalar_lea.sflag [#allocation3], %s144
          %s146 = sand.u32 %s39, 1
          %s147 = smul.addr %s146, 2
          %s148 = scalar_lea.vmem [#allocation2], %s147
          %s150 = ssub.s32 32, 32
          %151 = vsyncadd %s145, %s150
          %s152 = sadd.s32 %s22, %s23
          %s153 = smul.addr %s152, 32
          %s154 = scalar_lea.hbm %s0, %s153
          %s156 = sshll.u32 %s148, 4
          %s157 = int_to_ptr.vmem [resolvable:$true] %s156
          %159 = dma.hbm_to_vmem [thread:$0]  %s154, 32, %s157, %s145
        $region24: #{tpu_custom_call.1} parent=19 // pred_fallthru
          _
      $region20: #{tpu_custom_call.1} parent=5 // pred_fallthru
        _
      %p160 = scmp.le.s32.totalorder 1, %s15
      %p161 = scmp.lt.s32.totalorder %s15, 3
      %p162 = pnand %p160, %p161
      %p163 = pneg %p162
      // Predicated region
      $region25: #{tpu_custom_call.1} parent=5 // pred_check
        _
      $region26: #{tpu_custom_call.1} parent=5 // pred_check_branch
        %165 = sbr.rel (%p162) target = $region28
      $region27: #{tpu_custom_call.1} parent=5 // pred_region
        %s166 = ssub.s32 %s15, 1
        %s167 = sand.u32 %s42, 1
        %s168 = scalar_lea.sflag [#allocation3], %s167
        %s169 = sand.u32 %s42, 1
        %s170 = smul.addr %s169, 2
        %s171 = scalar_lea.vmem [#allocation2], %s170
        // Predicated region
        $region29: #{tpu_custom_call.1} parent=27 // pred_check
          %p172 = pneg %p55
        $region30: #{tpu_custom_call.1} parent=27 // pred_check_branch
          %174 = sbr.rel (%p172) target = $region32
        $region31: #{tpu_custom_call.1} parent=27 // pred_region
          %175 = dma.done %s168, 32
        $region32: #{tpu_custom_call.1} parent=27 // pred_fallthru
          _
        // Predicated region
        $region33: #{tpu_custom_call.1} parent=27 // pred_check
          %p176 = pneg %p81
        $region34: #{tpu_custom_call.1} parent=27 // pred_check_branch
          %178 = sbr.rel (%p176) target = $region36
        $region35: #{tpu_custom_call.1} parent=27 // pred_region
          %179 = dma.done [#allocation6], 32
        $region36: #{tpu_custom_call.1} parent=27 // pred_fallthru
          _
        %s180 = sand.u32 %s42, 1
        %s181 = scalar_lea.sflag [#allocation3], %s180
        %s182 = sand.u32 %s42, 1
        %s183 = smul.addr %s182, 2
        %s184 = scalar_lea.vmem [#allocation2], %s183
        %p185 = pneg %p55
        %p186 = pneg %p52
        %p187 = pneg %p81
        %p188 = pneg %p78
        %p189 = pneg %p109
        %p190 = pneg %p106
        %s191 = sand.u32 %s96, 1
        %s192 = scalar_lea.sflag [#allocation4], %s191
        %s193 = sand.u32 %s96, 1
        %s194 = smul.addr %s193, 2
        %s195 = scalar_lea.vmem [#allocation7], %s194
        %v196 = vld [vmem:[%s171] sm:$0x3]
        %v197 = vld [vmem:[#allocation5] sm:$0x3]
        %v198 = vadd.f32 %v196, %v197
        %199 = vst [vmem:[%s195] sm:$0x3] %v198
        %s200 = sand.u32 %s96, 1
        %s201 = scalar_lea.sflag [#allocation4], %s200
        %s202 = sand.u32 %s96, 1
        %s203 = smul.addr %s202, 2
        %s204 = scalar_lea.vmem [#allocation7], %s203
        // Predicated region
        $region37: #{tpu_custom_call.1} parent=27 // pred_check
          %p205 = pneg %p106
        $region38: #{tpu_custom_call.1} parent=27 // pred_check_branch
          %207 = sbr.rel (%p205) target = $region40
        $region39: #{tpu_custom_call.1} parent=27 // pred_region
          %s209 = ssub.s32 32, 32
          %210 = vsyncadd %s201, %s209
          %s211 = sadd.s32 %s24, %s25
          %s212 = smul.addr %s211, 32
          %s213 = scalar_lea.hbm %s2, %s212
          %s215 = sshll.u32 %s204, 4
          %s216 = int_to_ptr.vmem [resolvable:$true] %s215
          %218 = dma.vmem_to_hbm [thread:$0]  %s216, 32, %s213, %s201
        $region40: #{tpu_custom_call.1} parent=27 // pred_fallthru
          _
      $region28: #{tpu_custom_call.1} parent=5 // pred_fallthru
        _
      %p219 = scmp.le.s32.totalorder 2, %s15
      // Predicated region
      $region41: #{tpu_custom_call.1} parent=5 // pred_check
        %p220 = pneg %p219
      $region42: #{tpu_custom_call.1} parent=5 // pred_check_branch
        %222 = sbr.rel (%p220) target = $region44
      $region43: #{tpu_custom_call.1} parent=5 // pred_region
        %s223 = ssub.s32 %s15, 2
        // Predicated region
        $region45: #{tpu_custom_call.1} parent=43 // pred_check
          %p224 = pneg %p112
        $region46: #{tpu_custom_call.1} parent=43 // pred_check_branch
          %226 = sbr.rel (%p224) target = $region48
        $region47: #{tpu_custom_call.1} parent=43 // pred_region
          %s227 = sand.u32 %s97, 1
          %s228 = scalar_lea.sflag [#allocation4], %s227
          %s229 = sand.u32 %s97, 1
          %s230 = smul.addr %s229, 2
          %s231 = scalar_lea.vmem [#allocation7], %s230
          %232 = dma.done %s228, 32
        $region48: #{tpu_custom_call.1} parent=43 // pred_fallthru
          _
      $region44: #{tpu_custom_call.1} parent=5 // pred_fallthru
        _
    $region6: #{tpu_custom_call.1} parent=1 // loop_footer
      %s19 = sadd.s32 1, %s15
    $region7: #{tpu_custom_call.1} parent=1 // loop_footer_branch
      %14 = sbr.rel target = $region3
    $region8: #{tpu_custom_call.1} parent=1 // loop_exit
      _
    %233 = vsyncpa [#allocation3], 1
    %s234 = scalar_lea.sflag [#allocation3], 1
    %235 = vsyncpa %s234, 1
    %236 = vsyncpa [#allocation6], 1
    %237 = vsyncpa [#allocation4], 1
    %s238 = scalar_lea.sflag [#allocation4], 1
    %239 = vsyncpa %s238, 1

</llo_original>
